<compile_context>
chip_gen: v6e
topology: v6e:2x2x1
jax: 0.10.0
libtpu: 0.0.40
codegen_flags: <defaults>
</compile_context>

<pallas_src>
import jax
import jax.numpy as jnp
from jax.experimental import pallas as pl
from jax.experimental.pallas import tpu as pltpu

_LANE = 128
_SUBLANE = 8


def _round_up(v, m):
    return ((v + m - 1) // m) * m


def _max_batch_tile():
    """Generation-aware cap on the batch tile."""
    try:
        kind = jax.devices()[0].device_kind.lower()
    except Exception:
        return 256
    if "v5 lite" in kind or "v5e" in kind or "v5lite" in kind:
        return 128   # 4x 128x128 MXUs: 128-row tiles already fill them
    return 256       # v6e / v7x: 256-wide MXU


def _vmem_capacity_bytes():
    try:
        return int(pltpu.get_tpu_info().vmem_capacity_bytes)
    except Exception:
        return 64 * 1024 * 1024   # conservative: v7x per-TensorCore VMEM


def _pick_batch_tile(Bp):
    """Bp is the sublane-rounded batch. Returns a tile that is a multiple of
    16 (bf16 sublane packing), capped per generation, and sized so the batch
    grid has >=2 steps whenever Bp allows (v7x megacore)."""
    if Bp <= _SUBLANE:
        return _SUBLANE
    tm = min(_max_batch_tile(), _round_up(pl.cdiv(Bp, 2), 16))
    return min(max(tm, 16), Bp)


def pack_residual_block_params(w1, b1, w2, b2, *, compute_dtype=jnp.bfloat16):
    """One-time packing of PyTorch-layout Linear params.

    w1, w2: (out_dim, in_dim) = (D, D); b1, b2: (D,).
    Weights are transposed to (in_dim, out_dim), zero-padded to a multiple of
    128 lanes and cast to `compute_dtype`; biases are padded and kept in f32.
    Zero padding is exact: padded input lanes are 0 and padded weight rows /
    cols / bias entries are 0, so the original D output columns are unchanged.
    """
    D = w1.shape[0]
    Dp = _round_up(D, _LANE)
    pad = Dp - D

    def pack_w(w):
        return jnp.pad(w.T, ((0, pad), (0, pad))).astype(compute_dtype)

    def pack_b(b):
        return jnp.pad(b, (0, pad)).reshape(1, Dp).astype(jnp.float32)

    return {"dim": D, "w1": pack_w(w1), "b1": pack_b(b1),
            "w2": pack_w(w2), "b2": pack_b(b2)}


def residual_block_kernel(x_ref, w1_ref, b1_ref, w2_ref, b2_ref, o_ref):
    # out = x + fc2(relu(fc1(x))).  Weights are pre-transposed to (in, out),
    # so both matmuls are plain row-major (tm, K) x (K, N) MXU contractions
    # (no in-kernel transpose).  f32 accumulation; bias/ReLU/residual in f32.
    x = x_ref[...]                                    # (tm, Dp) f32
    mx_dtype = w1_ref.dtype                           # bf16 (default) or f32
    h = jnp.dot(x.astype(mx_dtype), w1_ref[...],
                preferred_element_type=jnp.float32)   # fc1 -> (tm, Dp) f32
    h = jnp.maximum(h + b1_ref[...], 0.0)
    y = jnp.dot(h.astype(mx_dtype), w2_ref[...],
                preferred_element_type=jnp.float32)   # fc2 -> (tm, Dp) f32
    o_ref[...] = (x + y + b2_ref[...]).astype(o_ref.dtype)


def residual_block(t, x, params):
    """Mirrors ResidualBlock.forward(t, x); `t` is unused (as in the module).

    x: (B, D) float32.  params: output of pack_residual_block_params().
    Returns (B, D) float32.
    """
    del t  # unused by the reference module's forward
    B, D = x.shape
    assert D == params["dim"], "params were packed for a different input_dim"
    w1_p, b1_p = params["w1"], params["b1"]
    w2_p, b2_p = params["w2"], params["b2"]
    Dp = w1_p.shape[0]
    wbytes = jnp.dtype(w1_p.dtype).itemsize

    # Pad batch only to the next sublane multiple (<= 7 rows); pad features
    # only when D is not already lane-dense.
    Bp = _round_up(B, _SUBLANE)
    if Bp != B or Dp != D:
        x_p = jnp.pad(x, ((0, Bp - B), (0, Dp - D)))
    else:
        x_p = x

    tm = _pick_batch_tile(Bp)
    n_steps = pl.cdiv(Bp, tm)
    grid = (n_steps,)

    # Small-Dp steps have too little MXU work to hide the (tm, Dp) DMAs; use
    # a 3-deep activation pipeline there (when the grid is long enough).
    act_mode = pl.Buffered(3) if (Dp <= 512 and n_steps >= 3) else None
    act_buffers = 3 if act_mode is not None else 2
    resident = pl.Buffered(1)   # grid-invariant operands: single resident copy

    # VMEM budget: resident weights + biases, multi-buffered x/out tiles, and
    # the in-kernel intermediates (h/y in f32 plus narrow copies of x and h).
    vmem_needed = (2 * Dp * Dp * wbytes + 2 * Dp * 4
                   + 2 * act_buffers * tm * Dp * 4
                   + tm * Dp * (2 * 4 + 2 * wbytes))
    vmem_cap = _vmem_capacity_bytes()
    vmem_limit = int(min(max(int(vmem_needed * 1.25), 32 * 1024 * 1024),
                         int(vmem_cap * 0.85)))
    # TODO(synk): once the resident 2*Dp^2 weight bytes no longer fit the
    # scoped VMEM (Dp ~ 3.3K on v7x's 64 MiB), add grid axes that stream
    # weight tiles through an f32 accumulator instead of only raising the
    # limit.

    flops = 4 * Bp * Dp * Dp                      # two (Bp,Dp) x (Dp,Dp) matmuls
    bytes_accessed = (2 * Bp * Dp * 4             # x in + out
                      + 2 * Dp * Dp * wbytes      # weights
                      + 2 * Dp * 4)               # biases

    out_p = pl.pallas_call(
        residual_block_kernel,
        out_shape=jax.ShapeDtypeStruct((Bp, Dp), x.dtype),
        grid_spec=pltpu.PrefetchScalarGridSpec(
            num_scalar_prefetch=0,
            grid=grid,
            in_specs=[
                pl.BlockSpec((tm, Dp), lambda i: (i, 0),
                             pipeline_mode=act_mode),       # x, tiled over batch
                pl.BlockSpec((Dp, Dp), lambda i: (0, 0),
                             pipeline_mode=resident),       # W1 (in,out), resident
                pl.BlockSpec((1, Dp), lambda i: (0, 0),
                             pipeline_mode=resident),       # b1, resident
                pl.BlockSpec((Dp, Dp), lambda i: (0, 0),
                             pipeline_mode=resident),       # W2 (in,out), resident
                pl.BlockSpec((1, Dp), lambda i: (0, 0),
                             pipeline_mode=resident),       # b2, resident
            ],
            out_specs=pl.BlockSpec((tm, Dp), lambda i: (i, 0),
                                   pipeline_mode=act_mode),
        ),
        compiler_params=pltpu.CompilerParams(
            dimension_semantics=("parallel",),
            vmem_limit_bytes=vmem_limit),
        cost_estimate=pl.CostEstimate(
            flops=flops, transcendentals=0, bytes_accessed=bytes_accessed),
    )(x_p, w1_p, b1_p, w2_p, b2_p)

    return out_p[:B, :D]


def residual_block_ref(x, w1, b1, w2, b2):
    """Pure-JAX f32 reference mirroring the PyTorch forward (highest precision)."""
    h = jnp.maximum(
        jnp.dot(x, w1.T, precision=jax.lax.Precision.HIGHEST) + b1, 0.0)
    return x + (jnp.dot(h, w2.T, precision=jax.lax.Precision.HIGHEST) + b2)


if __name__ == "__main__":
    B, D = 8, 32  # batch, input_dim (matches nn.Linear(input_dim, input_dim))
    key = jax.random.PRNGKey(0)
    kx, kw1, kb1, kw2, kb2 = jax.random.split(key, 5)

    x = jax.random.normal(kx, (B, D), dtype=jnp.float32)
    t = jnp.zeros((B, 1), dtype=jnp.float32)   # unused by forward(t, x)
    bound = 1.0 / (D ** 0.5)
    w1 = jax.random.uniform(kw1, (D, D), minval=-bound, maxval=bound, dtype=jnp.float32)
    b1 = jax.random.uniform(kb1, (D,),   minval=-bound, maxval=bound, dtype=jnp.float32)
    w2 = jax.random.uniform(kw2, (D, D), minval=-bound, maxval=bound, dtype=jnp.float32)
    b2 = jax.random.uniform(kb2, (D,),   minval=-bound, maxval=bound, dtype=jnp.float32)

    ref = residual_block_ref(x, w1, b1, w2, b2)

    # Default bf16-MXU path (f32 accumulation + f32 epilogue).
    params = pack_residual_block_params(w1, b1, w2, b2)
    out = jax.block_until_ready(residual_block(t, x, params))
    assert out.shape == (B, D)
    assert jnp.allclose(out, ref, atol=5e-2, rtol=5e-2), "bf16 path mismatch"

    # f32 parity path (closer match to the f32 PyTorch reference).
    params_f32 = pack_residual_block_params(w1, b1, w2, b2,
                                            compute_dtype=jnp.float32)
    out_f32 = jax.block_until_ready(residual_block(t, x, params_f32))
    assert jnp.allclose(out_f32, ref, atol=1e-3, rtol=1e-3), "f32 path mismatch"

    print("KERNEL_OK")
</pallas_src>

<mosaic_0001>
module attributes {stable_mosaic.version = 11 : i64} {
  func.func @residual_block_kernel(%arg0: i32, %arg1: memref<8x128xf32, #tpu.memory_space<vmem>>, %arg2: memref<128x128xbf16, #tpu.memory_space<vmem>>, %arg3: memref<1x128xf32, #tpu.memory_space<vmem>>, %arg4: memref<128x128xbf16, #tpu.memory_space<vmem>>, %arg5: memref<1x128xf32, #tpu.memory_space<vmem>>, %arg6: memref<8x128xf32, #tpu.memory_space<vmem>>) attributes {dimension_semantics = [#tpu.dimension_semantics<parallel>], iteration_bounds = array<i64: 1>, scalar_prefetch = 0 : i64, scratch_operands = 0 : i64, tpu.core_type = #tpu.core_type<tc>, window_params = [{transform_indices = @transform_0, window_bounds = array<i64: 8, 128>}, {pipeline_mode = #tpu.pipeline_mode<synchronous>, transform_indices = @transform_1, window_bounds = array<i64: 128, 128>}, {pipeline_mode = #tpu.pipeline_mode<synchronous>, transform_indices = @transform_2, window_bounds = array<i64: 1, 128>}, {pipeline_mode = #tpu.pipeline_mode<synchronous>, transform_indices = @transform_3, window_bounds = array<i64: 128, 128>}, {pipeline_mode = #tpu.pipeline_mode<synchronous>, transform_indices = @transform_4, window_bounds = array<i64: 1, 128>}, {transform_indices = @transform_5, window_bounds = array<i64: 8, 128>}]} {
    %c0 = arith.constant 0 : index
    %c0_0 = arith.constant 0 : index
    %0 = vector.load %arg1[%c0, %c0_0] : memref<8x128xf32, #tpu.memory_space<vmem>>, vector<8x128xf32>
    %1 = arith.truncf %0 : vector<8x128xf32> to vector<8x128xbf16>
    %c0_1 = arith.constant 0 : index
    %c0_2 = arith.constant 0 : index
    %2 = vector.load %arg2[%c0_1, %c0_2] : memref<128x128xbf16, #tpu.memory_space<vmem>>, vector<128x128xbf16>
    %cst = arith.constant dense<0.000000e+00> : vector<8x128xf32>
    %3 = tpu.matmul %1, %2, %cst {dimension_numbers = #tpu.dot_dimension_numbers<[1], [0], [0], [1], [0, 0, 1, 1], [], []>} : vector<8x128xbf16>, vector<128x128xbf16>, vector<8x128xf32> -> vector<8x128xf32>
    %c0_3 = arith.constant 0 : index
    %c0_4 = arith.constant 0 : index
    %4 = vector.load %arg3[%c0_3, %c0_4] : memref<1x128xf32, #tpu.memory_space<vmem>>, vector<1x128xf32>
    %5 = vector.broadcast %4 : vector<1x128xf32> to vector<8x128xf32>
    %6 = arith.addf %3, %5 : vector<8x128xf32>
    %cst_5 = arith.constant 0.000000e+00 : f32
    %7 = vector.broadcast %cst_5 : f32 to vector<8x128xf32>
    %8 = arith.maximumf %6, %7 : vector<8x128xf32>
    %9 = arith.truncf %8 : vector<8x128xf32> to vector<8x128xbf16>
    %c0_6 = arith.constant 0 : index
    %c0_7 = arith.constant 0 : index
    %10 = vector.load %arg4[%c0_6, %c0_7] : memref<128x128xbf16, #tpu.memory_space<vmem>>, vector<128x128xbf16>
    %cst_8 = arith.constant dense<0.000000e+00> : vector<8x128xf32>
    %11 = tpu.matmul %9, %10, %cst_8 {dimension_numbers = #tpu.dot_dimension_numbers<[1], [0], [0], [1], [0, 0, 1, 1], [], []>} : vector<8x128xbf16>, vector<128x128xbf16>, vector<8x128xf32> -> vector<8x128xf32>
    %12 = arith.addf %0, %11 : vector<8x128xf32>
    %c0_9 = arith.constant 0 : index
    %c0_10 = arith.constant 0 : index
    %13 = vector.load %arg5[%c0_9, %c0_10] : memref<1x128xf32, #tpu.memory_space<vmem>>, vector<1x128xf32>
    %14 = vector.broadcast %13 : vector<1x128xf32> to vector<8x128xf32>
    %15 = arith.addf %12, %14 : vector<8x128xf32>
    %c0_11 = arith.constant 0 : index
    %c0_12 = arith.constant 0 : index
    %16 = vector.load %arg6[%c0_11, %c0_12] : memref<8x128xf32, #tpu.memory_space<vmem>>, vector<8x128xf32>
    tpu.vector_store %arg6[%c0_11, %c0_12], %15 {strides = array<i32>} : memref<8x128xf32, #tpu.memory_space<vmem>>, vector<8x128xf32>,
    return
  }
  func.func @transform_0(%arg0: i32) -> (i32, i32) {
    %c0_i32 = arith.constant 0 : i32
    %c0_i32_0 = arith.constant 0 : i32
    return %arg0, %c0_i32 : i32, i32
  }
  func.func @transform_1(%arg0: i32) -> (i32, i32) {
    %c0_i32 = arith.constant 0 : i32
    %c0_i32_0 = arith.constant 0 : i32
    %c0_i32_1 = arith.constant 0 : i32
    return %c0_i32, %c0_i32_0 : i32, i32
  }
  func.func @transform_2(%arg0: i32) -> (i32, i32) {
    %c0_i32 = arith.constant 0 : i32
    %c0_i32_0 = arith.constant 0 : i32
    %c0_i32_1 = arith.constant 0 : i32
    return %c0_i32, %c0_i32_0 : i32, i32
  }
  func.func @transform_3(%arg0: i32) -> (i32, i32) {
    %c0_i32 = arith.constant 0 : i32
    %c0_i32_0 = arith.constant 0 : i32
    %c0_i32_1 = arith.constant 0 : i32
    return %c0_i32, %c0_i32_0 : i32, i32
  }
  func.func @transform_4(%arg0: i32) -> (i32, i32) {
    %c0_i32 = arith.constant 0 : i32
    %c0_i32_0 = arith.constant 0 : i32
    %c0_i32_1 = arith.constant 0 : i32
    return %c0_i32, %c0_i32_0 : i32, i32
  }
  func.func @transform_5(%arg0: i32) -> (i32, i32) {
    %c0_i32 = arith.constant 0 : i32
    %c0_i32_0 = arith.constant 0 : i32
    return %arg0, %c0_i32 : i32, i32
  }
}

</mosaic_0001>

<llo_original>
// kernel: tpu_custom_call.1
$region0: #{tpu_custom_call.1}
  #allocation0 [shape = 'u32[]', space=smem, size = 0x4, offset = 0x4, fixed_abs, tag = 'smem constant byte address 0x4 - core index']
  #allocation1 [shape = 'u32[144,128]{1,0:T(1,128)}', space=vmem, size = 0x12000, scoped, tag = 'internal scratch']
  %s0 = inlined_call_operand.hbm [shape: f32[8,128], index: 0, kind: input, shape index: {}]
  %s1 = inlined_call_operand.hbm [shape: bf16[128,128], index: 1, kind: input, shape index: {}]
  %s2 = inlined_call_operand.vmem [shape: f32[1,128], index: 2, kind: input, shape index: {}]
  %s3 = inlined_call_operand.hbm [shape: bf16[128,128], index: 3, kind: input, shape index: {}]
  %s4 = inlined_call_operand.vmem [shape: f32[1,128], index: 4, kind: input, shape index: {}]
  %s5 = inlined_call_operand.hbm [shape: f32[8,128], index: 5, kind: output, shape index: {}]
  %s6 = sld [smem:[#allocation0]]
  $region42: #{tpu_custom_call.1} parent=0
    _
  %s8 = ssub.s32 1, %s6
  %s9 = scalar_select 0, %s8, %s6
  $region1: #{tpu_custom_call.1} parent=0
    #allocation2 [shape = 'u8[4096]{0}', space=vmem, size = 0x1000, scoped, tag = 'input window, operand 0, single buffered']
    #allocation3 [shape = 's32[1]{0}', space=sflag, size = 0x4, scoped, tag = 'scoped memory for tpu_custom_call.1']
    #allocation4 [shape = 's32[1]{0}', space=sflag, size = 0x4, scoped, tag = 'scoped memory for tpu_custom_call.1']
    #allocation5 [shape = 'u8[32768]{0}', space=vmem, size = 0x8000, scoped, tag = 'input window, operand 1, single buffered']
    #allocation6 [shape = 's32[1]{0}', space=sflag, size = 0x4, scoped, tag = 'scoped memory for tpu_custom_call.1']
    #allocation7 [shape = 'u8[32768]{0}', space=vmem, size = 0x8000, scoped, tag = 'input window, operand 3, single buffered']
    #allocation8 [shape = 'u8[4096]{0}', space=vmem, size = 0x1000, scoped, tag = 'output window, operand 0, single buffered']
    %10 = vsyncpa [#allocation3], 0
    %11 = vsyncpa [#allocation6], 0
    %12 = vsyncpa [#allocation4], 0
    // Predicated region
    $region2: #{tpu_custom_call.1} parent=1 // pred_check
      _
    $region3: #{tpu_custom_call.1} parent=1 // pred_check_branch
      %14 = sbr.rel (0) target = $region5
    $region4: #{tpu_custom_call.1} parent=1 // pred_region
      %s16 = ssub.s32 128, 128
      %17 = vsyncadd [#allocation3], %s16
      %s19 = sshll.u32 [#allocation2], 4
      %s20 = int_to_ptr.vmem [resolvable:$true] %s19
      %22 = dma.hbm_to_vmem [thread:$0]  %s0, 128, %s20, [#allocation3]
    $region5: #{tpu_custom_call.1} parent=1 // pred_fallthru
      _
    // Predicated region
    $region6: #{tpu_custom_call.1} parent=1 // pred_check
      _
    $region7: #{tpu_custom_call.1} parent=1 // pred_check_branch
      %24 = sbr.rel (0) target = $region9
    $region8: #{tpu_custom_call.1} parent=1 // pred_region
      %s26 = ssub.s32 1024, 1024
      %27 = vsyncadd [#allocation6], %s26
      %s28 = sshll.u32 [#allocation5], 4
      %s29 = int_to_ptr.vmem [resolvable:$true] %s28
      %34 = dma.hbm_to_vmem [thread:$0]  %s1, 1024, %s29, [#allocation6], 64, 64, 4
    $region9: #{tpu_custom_call.1} parent=1 // pred_fallthru
      _
    // Predicated region
    $region10: #{tpu_custom_call.1} parent=1 // pred_check
      _
    $region11: #{tpu_custom_call.1} parent=1 // pred_check_branch
      %36 = sbr.rel (0) target = $region13
    $region12: #{tpu_custom_call.1} parent=1 // pred_region
      _
    $region13: #{tpu_custom_call.1} parent=1 // pred_fallthru
      _
    // Predicated region
    $region14: #{tpu_custom_call.1} parent=1 // pred_check
      _
    $region15: #{tpu_custom_call.1} parent=1 // pred_check_branch
      %38 = sbr.rel (0) target = $region17
    $region16: #{tpu_custom_call.1} parent=1 // pred_region
      %s40 = ssub.s32 1024, 1024
      %41 = vsyncadd [#allocation6], %s40
      %s42 = sshll.u32 [#allocation7], 4
      %s43 = int_to_ptr.vmem [resolvable:$true] %s42
      %48 = dma.hbm_to_vmem [thread:$0]  %s3, 1024, %s43, [#allocation6], 64, 64, 4
    $region17: #{tpu_custom_call.1} parent=1 // pred_fallthru
      _
    // Predicated region
    $region18: #{tpu_custom_call.1} parent=1 // pred_check
      _
    $region19: #{tpu_custom_call.1} parent=1 // pred_check_branch
      %50 = sbr.rel (0) target = $region21
    $region20: #{tpu_custom_call.1} parent=1 // pred_region
      _
    $region21: #{tpu_custom_call.1} parent=1 // pred_fallthru
      _
    // Predicated region
    $region22: #{tpu_custom_call.1} parent=1 // pred_check
      _
    $region23: #{tpu_custom_call.1} parent=1 // pred_check_branch
      %52 = sbr.rel (0) target = $region25
    $region24: #{tpu_custom_call.1} parent=1 // pred_region
      %53 = dma.done [#allocation3], 128
    $region25: #{tpu_custom_call.1} parent=1 // pred_fallthru
      _
    // Predicated region
    $region26: #{tpu_custom_call.1} parent=1 // pred_check
      _
    $region27: #{tpu_custom_call.1} parent=1 // pred_check_branch
      %55 = sbr.rel (0) target = $region29
    $region28: #{tpu_custom_call.1} parent=1 // pred_region
      %56 = dma.done [#allocation6], 1024
    $region29: #{tpu_custom_call.1} parent=1 // pred_fallthru
      _
    // Predicated region
    $region30: #{tpu_custom_call.1} parent=1 // pred_check
      _
    $region31: #{tpu_custom_call.1} parent=1 // pred_check_branch
      %58 = sbr.rel (0) target = $region33
    $region32: #{tpu_custom_call.1} parent=1 // pred_region
      %59 = dma.done [#allocation6], 1024
    $region33: #{tpu_custom_call.1} parent=1 // pred_fallthru
      _
    %v61 = vld [vmem:[#allocation2] sm:$0xff]
    %v62 = vpack.c.bf16 %v61, %v61
    %v63 = vld [vmem:[#allocation5] sm:$0xf]
    %v64 = vld [vmem:[#allocation5 + $0x4] sm:$0xf]
    %v65 = vld [vmem:[#allocation5 + $0x8] sm:$0xf]
    %v66 = vld [vmem:[#allocation5 + $0xc] sm:$0xf]
    %v67 = vld [vmem:[#allocation5 + $0x10] sm:$0xf]
    %v68 = vld [vmem:[#allocation5 + $0x14] sm:$0xf]
    %v69 = vld [vmem:[#allocation5 + $0x18] sm:$0xf]
    %v70 = vld [vmem:[#allocation5 + $0x1c] sm:$0xf]
    %v71 = vld [vmem:[#allocation5 + $0x20] sm:$0xf]
    %v72 = vld [vmem:[#allocation5 + $0x24] sm:$0xf]
    %v73 = vld [vmem:[#allocation5 + $0x28] sm:$0xf]
    %v74 = vld [vmem:[#allocation5 + $0x2c] sm:$0xf]
    %v75 = vld [vmem:[#allocation5 + $0x30] sm:$0xf]
    %v76 = vld [vmem:[#allocation5 + $0x34] sm:$0xf]
    %v77 = vld [vmem:[#allocation5 + $0x38] sm:$0xf]
    %v78 = vld [vmem:[#allocation5 + $0x3c] sm:$0xf]
    %v79 = vld [vmem:[%s2] sm:$0x1]
    %v81 = vlaneseq
    %v82 = vshrl.u32 %v81, 7
    %v83 = vsub.s32 0, %v82
    %v84 = vrot.slane %v79, %v83
    %v102 = vunpack.c.l.b16 %v63
    %v103 = vunpack.c.l.b16 %v64
    %v104 = vunpack.c.l.b16 %v65
    %v105 = vunpack.c.l.b16 %v66
    %v106 = vunpack.c.l.b16 %v67
    %v107 = vunpack.c.l.b16 %v68
    %v108 = vunpack.c.l.b16 %v69
    %v109 = vunpack.c.l.b16 %v70
    %v110 = vunpack.c.l.b16 %v71
    %v111 = vunpack.c.l.b16 %v72
    %v112 = vunpack.c.l.b16 %v73
    %v113 = vunpack.c.l.b16 %v74
    %v114 = vunpack.c.l.b16 %v75
    %v115 = vunpack.c.l.b16 %v76
    %v116 = vunpack.c.l.b16 %v77
    %v117 = vunpack.c.l.b16 %v78
    %v118 = vpack.c.b16 %v103, %v102
    %v119 = vpack.c.b16 %v105, %v104
    %v120 = vpack.c.b16 %v107, %v106
    %v121 = vpack.c.b16 %v109, %v108
    %v122 = vpack.c.b16 %v111, %v110
    %v123 = vpack.c.b16 %v113, %v112
    %v124 = vpack.c.b16 %v115, %v114
    %v125 = vpack.c.b16 %v117, %v116
    %134 = vmatprep.subr.bf16.mxu0 0
    %135 = vmatpush1.bf16.msra.mxu0 %v125
    %136 = vmatprep.subr.bf16.mxu0 0
    %137 = vmatpush1.bf16.msra.mxu0 %v124
    %138 = vmatprep.subr.bf16.mxu0 0
    %139 = vmatpush1.bf16.msra.mxu0 %v123
    %140 = vmatprep.subr.bf16.mxu0 0
    %141 = vmatpush1.bf16.msra.mxu0 %v122
    %142 = vmatprep.subr.bf16.mxu0 0
    %143 = vmatpush1.bf16.msra.mxu0 %v121
    %144 = vmatprep.subr.bf16.mxu0 0
    %145 = vmatpush1.bf16.msra.mxu0 %v120
    %146 = vmatprep.subr.bf16.mxu0 0
    %147 = vmatpush1.bf16.msra.mxu0 %v119
    %148 = vmatprep.subr.bf16.mxu0 0
    %149 = vmatpush1.bf16.msra.mxu0 %v118
    %150 = vmatprep.subr.bf16.mxu0 0
    %151 = vmatpush2.bf16.msra.mxu0 0
    %152 = vmatprep.subr.bf16.mxu0 0
    %153 = vmatpush2.bf16.msra.mxu0 0
    %154 = vmatprep.subr.bf16.mxu0 0
    %155 = vmatpush2.bf16.msra.mxu0 0
    %156 = vmatprep.subr.bf16.mxu0 0
    %157 = vmatpush2.bf16.msra.mxu0 0
    %158 = vmatprep.subr.bf16.mxu0 0
    %159 = vmatpush2.bf16.msra.mxu0 0
    %160 = vmatprep.subr.bf16.mxu0 0
    %161 = vmatpush2.bf16.msra.mxu0 0
    %162 = vmatprep.subr.bf16.mxu0 0
    %163 = vmatpush2.bf16.msra.mxu0 0
    %164 = vmatprep.subr.bf16.mxu0 0
    %165 = vmatpush2.bf16.msra.mxu0 0
    %166 = vmatprep.mubr.bf16.mxu0 0
    %167 = vmatmul.mubr.bf16.gmra.mxu0 %v62
    %v168 = vpop.f32.mrf.mxu0
    %v169 = vadd.f32 %v84, %v168
    %v170 = vpop.f32.mrf.mxu0
    %v171 = vpop.f32.mrf.mxu0
    %v172 = vpop.f32.mrf.mxu0
    %173 = vdwg.mxu0
    %v174 = vmax.f32 %v169, 0.0
    %v175 = vpack.c.bf16 %v174, %v174
    %v176 = vld [vmem:[#allocation7] sm:$0xf]
    %v177 = vld [vmem:[#allocation7 + $0x4] sm:$0xf]
    %v178 = vld [vmem:[#allocation7 + $0x8] sm:$0xf]
    %v179 = vld [vmem:[#allocation7 + $0xc] sm:$0xf]
    %v180 = vld [vmem:[#allocation7 + $0x10] sm:$0xf]
    %v181 = vld [vmem:[#allocation7 + $0x14] sm:$0xf]
    %v182 = vld [vmem:[#allocation7 + $0x18] sm:$0xf]
    %v183 = vld [vmem:[#allocation7 + $0x1c] sm:$0xf]
    %v184 = vld [vmem:[#allocation7 + $0x20] sm:$0xf]
    %v185 = vld [vmem:[#allocation7 + $0x24] sm:$0xf]
    %v186 = vld [vmem:[#allocation7 + $0x28] sm:$0xf]
    %v187 = vld [vmem:[#allocation7 + $0x2c] sm:$0xf]
    %v188 = vld [vmem:[#allocation7 + $0x30] sm:$0xf]
    %v189 = vld [vmem:[#allocation7 + $0x34] sm:$0xf]
    %v190 = vld [vmem:[#allocation7 + $0x38] sm:$0xf]
    %v191 = vld [vmem:[#allocation7 + $0x3c] sm:$0xf]
    %v208 = vunpack.c.l.b16 %v176
    %v209 = vunpack.c.l.b16 %v177
    %v210 = vunpack.c.l.b16 %v178
    %v211 = vunpack.c.l.b16 %v179
    %v212 = vunpack.c.l.b16 %v180
    %v213 = vunpack.c.l.b16 %v181
    %v214 = vunpack.c.l.b16 %v182
    %v215 = vunpack.c.l.b16 %v183
    %v216 = vunpack.c.l.b16 %v184
    %v217 = vunpack.c.l.b16 %v185
    %v218 = vunpack.c.l.b16 %v186
    %v219 = vunpack.c.l.b16 %v187
    %v220 = vunpack.c.l.b16 %v188
    %v221 = vunpack.c.l.b16 %v189
    %v222 = vunpack.c.l.b16 %v190
    %v223 = vunpack.c.l.b16 %v191
    %v224 = vpack.c.b16 %v209, %v208
    %v225 = vpack.c.b16 %v211, %v210
    %v226 = vpack.c.b16 %v213, %v212
    %v227 = vpack.c.b16 %v215, %v214
    %v228 = vpack.c.b16 %v217, %v216
    %v229 = vpack.c.b16 %v219, %v218
    %v230 = vpack.c.b16 %v221, %v220
    %v231 = vpack.c.b16 %v223, %v222
    %240 = vmatprep.subr.bf16.mxu0 0
    %241 = vmatpush1.bf16.msra.mxu0 %v231
    %242 = vmatprep.subr.bf16.mxu0 0
    %243 = vmatpush1.bf16.msra.mxu0 %v230
    %244 = vmatprep.subr.bf16.mxu0 0
    %245 = vmatpush1.bf16.msra.mxu0 %v229
    %246 = vmatprep.subr.bf16.mxu0 0
    %247 = vmatpush1.bf16.msra.mxu0 %v228
    %248 = vmatprep.subr.bf16.mxu0 0
    %249 = vmatpush1.bf16.msra.mxu0 %v227
    %250 = vmatprep.subr.bf16.mxu0 0
    %251 = vmatpush1.bf16.msra.mxu0 %v226
    %252 = vmatprep.subr.bf16.mxu0 0
    %253 = vmatpush1.bf16.msra.mxu0 %v225
    %254 = vmatprep.subr.bf16.mxu0 0
    %255 = vmatpush1.bf16.msra.mxu0 %v224
    %256 = vmatprep.subr.bf16.mxu0 0
    %257 = vmatpush2.bf16.msra.mxu0 0
    %258 = vmatprep.subr.bf16.mxu0 0
    %259 = vmatpush2.bf16.msra.mxu0 0
    %260 = vmatprep.subr.bf16.mxu0 0
    %261 = vmatpush2.bf16.msra.mxu0 0
    %262 = vmatprep.subr.bf16.mxu0 0
    %263 = vmatpush2.bf16.msra.mxu0 0
    %264 = vmatprep.subr.bf16.mxu0 0
    %265 = vmatpush2.bf16.msra.mxu0 0
    %266 = vmatprep.subr.bf16.mxu0 0
    %267 = vmatpush2.bf16.msra.mxu0 0
    %268 = vmatprep.subr.bf16.mxu0 0
    %269 = vmatpush2.bf16.msra.mxu0 0
    %270 = vmatprep.subr.bf16.mxu0 0
    %271 = vmatpush2.bf16.msra.mxu0 0
    %272 = vmatprep.mubr.bf16.mxu0 0
    %273 = vmatmul.mubr.bf16.gmra.mxu0 %v175
    %v274 = vpop.f32.mrf.mxu0
    %v275 = vadd.f32 0.0, %v274
    %v276 = vpop.f32.mrf.mxu0
    %v277 = vpop.f32.mrf.mxu0
    %v278 = vpop.f32.mrf.mxu0
    %279 = vdwg.mxu0
    %v280 = vadd.f32 %v61, %v275
    %v281 = vld [vmem:[%s4] sm:$0x1]
    %v283 = vlaneseq
    %v284 = vshrl.u32 %v283, 7
    %v285 = vsub.s32 0, %v284
    %v286 = vrot.slane %v281, %v285
    %v288 = vadd.f32 %v280, %v286
    %289 = vst [vmem:[#allocation8] sm:$0xff] %v288
    // Predicated region
    $region34: #{tpu_custom_call.1} parent=1 // pred_check
      _
    $region35: #{tpu_custom_call.1} parent=1 // pred_check_branch
      %291 = sbr.rel (0) target = $region37
    $region36: #{tpu_custom_call.1} parent=1 // pred_region
      %s293 = ssub.s32 128, 128
      %294 = vsyncadd [#allocation4], %s293
      %s296 = sshll.u32 [#allocation8], 4
      %s297 = int_to_ptr.vmem [resolvable:$true] %s296
      %299 = dma.vmem_to_hbm [thread:$0]  %s297, 128, %s5, [#allocation4]
    $region37: #{tpu_custom_call.1} parent=1 // pred_fallthru
      _
    // Predicated region
    $region38: #{tpu_custom_call.1} parent=1 // pred_check
      _
    $region39: #{tpu_custom_call.1} parent=1 // pred_check_branch
      %301 = sbr.rel (0) target = $region41
    $region40: #{tpu_custom_call.1} parent=1 // pred_region
      %302 = dma.done [#allocation4], 128
    $region41: #{tpu_custom_call.1} parent=1 // pred_fallthru
      _
    %303 = vsyncpa [#allocation3], 1
    %304 = vsyncpa [#allocation6], 1
    %305 = vsyncpa [#allocation4], 1

</llo_original>
